<compile_context>
chip_gen: v7x
topology: tpu7x:2x2x1
jax: 0.10.0
libtpu: 0.0.40
codegen_flags: <defaults>
</compile_context>

<pallas_src>
import jax
import jax.numpy as jnp
from jax.experimental import pallas as pl
from jax.experimental.pallas import tpu as pltpu


def attention_channel(encoder_out, decoder_hidden, params):
    """Pallas wrapper.  All tensors fit in VMEM at these shapes -> single
    kernel invocation (no grid), whole-array blocks."""
    B, P, E = encoder_out.shape
    D = decoder_hidden.shape[1]
    A = params['w_enc'].shape[1]
    f32 = jnp.float32

    # ---- wrapper-side prep (plain XLA ops, outside the kernel) -------------
    enc2d = encoder_out.reshape(B * P, E)                                  # (B*P, E)
    X = jnp.concatenate([enc2d, jnp.ones((B * P, 1), f32)], axis=1)        # (B*P, E+1)
    Xd = jnp.concatenate([decoder_hidden, jnp.ones((B, 1), f32)], axis=1)  # (B, D+1)

    # Fused projection weight; biases folded as the last contraction row:
    #   Wp[:, :A] -> encoder_att (att1),  Wp[:, A:] -> out_att (image_feature)
    Wp = jnp.concatenate([
        jnp.concatenate([params['w_enc'], params['w_out']], axis=1),       # (E, 2A)
        jnp.concatenate([params['b_enc'], params['b_out']], axis=1),       # (1, 2A)
    ], axis=0)                                                             # (E+1, 2A)
    Wd = jnp.concatenate([params['w_dec'], params['b_dec']], axis=0)       # (D+1, A)

    # Row-broadcast matrix: R[b*P+p, b] = 1 (repeats a per-batch row over its P pixels).
    R = jnp.kron(jnp.eye(B, dtype=f32), jnp.ones((P, 1), f32))             # (B*P, B)
    # Block-diagonal pixel reduction: S[b, b*P+p] = w_full[p].
    S = jnp.kron(jnp.eye(B, dtype=f32), params['w_full'][:, 0][None, :])   # (B, B*P)
    # Lane-shift placement constant: Pshift[a, A+a] = 1 (alpha -> lanes [A, 2A)).
    Pshift = jnp.concatenate([jnp.zeros((A, A), f32),
                              jnp.eye(A, dtype=f32)], axis=1)              # (A, 2A)

    b_full = params['b_full'].reshape(1).astype(f32)                       # (1,) scalar -> SMEM

    def kernel(x_ref, xd_ref, wp_ref, wd_ref, r_ref, s_ref, pshift_ref,
               b_full_ref, alpha_ref, out_ref):
        # One lane-dense MXU matmul covers encoder_att AND out_att (+ biases):
        #   proj[:, :A] = att1,  proj[:, A:] = image_feature
        proj = jnp.dot(x_ref[...], wp_ref[...],
                       preferred_element_type=jnp.float32)                 # (B*P, 2A)

        # att2 = decoder_att(decoder_hidden) (bias folded), broadcast over the
        # P pixel rows of each batch with the repeat matrix R (MXU, no reshape).
        att2 = jnp.dot(xd_ref[...], wd_ref[...],
                       preferred_element_type=jnp.float32)                 # (B, A)
        att2_rows = jnp.dot(r_ref[...], att2,
                            preferred_element_type=jnp.float32)            # (B*P, A)

        # relu(att1 + att2); zero-offset lane slice of proj is cheap.
        # TODO(synk): training-mode dropout (p=0.5) omitted; eval-mode (identity) semantics used.
        h = jnp.maximum(proj[:, :A] + att2_rows, 0.0)                      # (B*P, A)

        # full_att over pixels as an MXU contraction with block-diagonal S:
        #   att[b, a] = sum_p h[b*P+p, a] * w_full[p] + b_full
        att = jnp.dot(s_ref[...], h,
                      preferred_element_type=jnp.float32) + b_full_ref[0]  # (B, A)

        # softmax over the channel dim (PyTorch Softmax(dim=1) on a (B, A) tensor)
        m = jnp.max(att, axis=1, keepdims=True)
        e = jnp.exp(att - m)
        alpha = e * pl.reciprocal(jnp.sum(e, axis=1, keepdims=True), approx=True)  # (B, A)
        alpha_ref[...] = alpha.astype(alpha_ref.dtype)

        # (image_feature * alpha).sum over channels WITHOUT slicing proj at lane
        # offset A: shift the tiny alpha into lanes [A, 2A) (matmul against the
        # precomputed placement constant), row-broadcast it with R, multiply the
        # full-width proj slab and lane-reduce.
        alpha_sh = jnp.dot(alpha, pshift_ref[...],
                           preferred_element_type=jnp.float32)             # (B, 2A)
        alpha_rows = jnp.dot(r_ref[...], alpha_sh,
                             preferred_element_type=jnp.float32)           # (B*P, 2A)
        weighted = proj * alpha_rows
        out_ref[...] = jnp.sum(weighted, axis=1,
                               keepdims=True).astype(out_ref.dtype)        # (B*P, 1)

    vmem = pl.BlockSpec(memory_space=pltpu.MemorySpace.VMEM)
    smem = pl.BlockSpec(memory_space=pltpu.MemorySpace.SMEM)

    alpha, out_col = pl.pallas_call(
        kernel,
        out_shape=(jax.ShapeDtypeStruct((B, A), f32),
                   jax.ShapeDtypeStruct((B * P, 1), f32)),
        in_specs=[vmem,          # X   (B*P, E+1)
                  vmem,          # Xd  (B, D+1)
                  vmem,          # Wp  (E+1, 2A)
                  vmem,          # Wd  (D+1, A)
                  vmem,          # R   (B*P, B)
                  vmem,          # S   (B, B*P)
                  vmem,          # Pshift (A, 2A)
                  smem],         # b_full (1,) scalar
        out_specs=(vmem, vmem),
        # Harmless at this <200 KiB footprint; must be re-derived (<= ~48-56 MiB)
        # for the gridded v7x (64 MiB physical VMEM) production path.
        compiler_params=pltpu.CompilerParams(vmem_limit_bytes=32 * 1024 * 1024),
    )(X, Xd, Wp, Wd, R, S, Pshift, b_full)

    attention_weighted = out_col.reshape(B, P)                             # (B, P)
    return attention_weighted, alpha


def reference(encoder_out, decoder_hidden, params):
    """Pure-JAX reference of the PyTorch forward (eval mode)."""
    att1 = jnp.einsum('bpe,ea->bpa', encoder_out, params['w_enc']) + params['b_enc']
    att2 = decoder_hidden @ params['w_dec'] + params['b_dec']
    img = jnp.einsum('bpe,ea->bpa', encoder_out, params['w_out']) + params['b_out']
    h = jax.nn.relu(att1 + att2[:, None, :])
    att = jnp.einsum('bpa,p->ba', h, params['w_full'][:, 0]) + params['b_full'][0, 0]
    alpha = jax.nn.softmax(att, axis=1)
    out = jnp.sum(img * alpha[:, None, :], axis=2)
    return out, alpha


if __name__ == "__main__":
    # Small shapes consistent with the module:
    #   encoder_dim E=32, decoder_dim D=32, attention_chan_dim A=64,
    #   num_pixels == pixels_dim P=16, batch B=2.
    B, P, E, D, A = 2, 16, 32, 32, 64

    key = jax.random.PRNGKey(0)
    keys = jax.random.split(key, 12)

    encoder_out = jax.random.normal(keys[0], (B, P, E), dtype=jnp.float32)
    decoder_hidden = jax.random.normal(keys[1], (B, D), dtype=jnp.float32)

    def init_w(k, shape, fan_in):
        return jax.random.normal(k, shape, dtype=jnp.float32) / jnp.sqrt(fan_in)

    params = {
        'w_enc':  init_w(keys[2], (E, A), E),
        'b_enc':  init_w(keys[3], (1, A), E),
        'w_dec':  init_w(keys[4], (D, A), D),
        'b_dec':  init_w(keys[5], (1, A), D),
        'w_out':  init_w(keys[6], (E, A), E),
        'b_out':  init_w(keys[7], (1, A), E),
        'w_full': init_w(keys[8], (P, 1), P),   # full_att: Linear(pixels_dim, 1)
        'b_full': init_w(keys[9], (1, 1), P),
    }

    out, alpha = attention_channel(encoder_out, decoder_hidden, params)
    jax.block_until_ready((out, alpha))

    ref_out, ref_alpha = reference(encoder_out, decoder_hidden, params)
    assert out.shape == (B, P) and alpha.shape == (B, A)
    # 1e-3 tolerance: pl.reciprocal(approx=True) introduces ~2^-12 relative
    # error in the softmax normalization; everything else is f32-exact.
    assert jnp.allclose(out, ref_out, rtol=1e-3, atol=1e-3)
    assert jnp.allclose(alpha, ref_alpha, rtol=1e-3, atol=1e-3)

    print("KERNEL_OK")
</pallas_src>

<mosaic_0001>
module attributes {stable_mosaic.version = 11 : i64} {
  func.func @kernel(%arg0: memref<32x33xf32, #tpu.memory_space<vmem>>, %arg1: memref<2x33xf32, #tpu.memory_space<vmem>>, %arg2: memref<33x128xf32, #tpu.memory_space<vmem>>, %arg3: memref<33x64xf32, #tpu.memory_space<vmem>>, %arg4: memref<32x2xf32, #tpu.memory_space<vmem>>, %arg5: memref<2x32xf32, #tpu.memory_space<vmem>>, %arg6: memref<64x128xf32, #tpu.memory_space<vmem>>, %arg7: memref<1xf32, #tpu.memory_space<smem>>, %arg8: memref<2x64xf32, #tpu.memory_space<vmem>>, %arg9: memref<32x1xf32, #tpu.memory_space<vmem>>) attributes {dimension_semantics = [], scalar_prefetch = 0 : i64, scratch_operands = 0 : i64, tpu.core_type = #tpu.core_type<tc>} {
    %c0 = arith.constant 0 : index
    %c0_0 = arith.constant 0 : index
    %0 = vector.load %arg0[%c0, %c0_0] : memref<32x33xf32, #tpu.memory_space<vmem>>, vector<32x33xf32>
    %c0_1 = arith.constant 0 : index
    %c0_2 = arith.constant 0 : index
    %1 = vector.load %arg2[%c0_1, %c0_2] : memref<33x128xf32, #tpu.memory_space<vmem>>, vector<33x128xf32>
    %cst = arith.constant dense<0.000000e+00> : vector<32x128xf32>
    %2 = tpu.matmul %0, %1, %cst {dimension_numbers = #tpu.dot_dimension_numbers<[1], [0], [0], [1], [0, 0, 1, 1], [], []>} : vector<32x33xf32>, vector<33x128xf32>, vector<32x128xf32> -> vector<32x128xf32>
    %c0_3 = arith.constant 0 : index
    %c0_4 = arith.constant 0 : index
    %3 = vector.load %arg1[%c0_3, %c0_4] : memref<2x33xf32, #tpu.memory_space<vmem>>, vector<2x33xf32>
    %c0_5 = arith.constant 0 : index
    %c0_6 = arith.constant 0 : index
    %4 = vector.load %arg3[%c0_5, %c0_6] : memref<33x64xf32, #tpu.memory_space<vmem>>, vector<33x64xf32>
    %cst_7 = arith.constant dense<0.000000e+00> : vector<2x64xf32>
    %5 = tpu.matmul %3, %4, %cst_7 {dimension_numbers = #tpu.dot_dimension_numbers<[1], [0], [0], [1], [0, 0, 1, 1], [], []>} : vector<2x33xf32>, vector<33x64xf32>, vector<2x64xf32> -> vector<2x64xf32>
    %c0_8 = arith.constant 0 : index
    %c0_9 = arith.constant 0 : index
    %6 = vector.load %arg4[%c0_8, %c0_9] : memref<32x2xf32, #tpu.memory_space<vmem>>, vector<32x2xf32>
    %cst_10 = arith.constant dense<0.000000e+00> : vector<32x64xf32>
    %7 = tpu.matmul %6, %5, %cst_10 {dimension_numbers = #tpu.dot_dimension_numbers<[1], [0], [0], [1], [0, 0, 1, 1], [], []>} : vector<32x2xf32>, vector<2x64xf32>, vector<32x64xf32> -> vector<32x64xf32>
    %8 = vector.extract_strided_slice %2 {offsets = [0, 0], sizes = [32, 64], strides = [1, 1]} : vector<32x128xf32> to vector<32x64xf32>
    %9 = arith.addf %8, %7 : vector<32x64xf32>
    %cst_11 = arith.constant 0.000000e+00 : f32
    %10 = vector.broadcast %cst_11 : f32 to vector<32x64xf32>
    %11 = arith.maximumf %9, %10 : vector<32x64xf32>
    %c0_12 = arith.constant 0 : index
    %c0_13 = arith.constant 0 : index
    %12 = vector.load %arg5[%c0_12, %c0_13] : memref<2x32xf32, #tpu.memory_space<vmem>>, vector<2x32xf32>
    %cst_14 = arith.constant dense<0.000000e+00> : vector<2x64xf32>
    %13 = tpu.matmul %12, %11, %cst_14 {dimension_numbers = #tpu.dot_dimension_numbers<[1], [0], [0], [1], [0, 0, 1, 1], [], []>} : vector<2x32xf32>, vector<32x64xf32>, vector<2x64xf32> -> vector<2x64xf32>
    %c0_15 = arith.constant 0 : index
    %14 = memref.load %arg7[%c0_15] : memref<1xf32, #tpu.memory_space<smem>>
    %15 = vector.broadcast %14 : f32 to vector<2x64xf32>
    %16 = arith.addf %13, %15 : vector<2x64xf32>
    %cst_16 = arith.constant dense<0xFF800000> : vector<2xf32>
    %17 = vector.multi_reduction <maximumf>, %16, %cst_16 [1] : vector<2x64xf32> to vector<2xf32>
    %18 = vector.shape_cast %17 : vector<2xf32> to vector<2x1xf32>
    %19 = vector.broadcast %18 : vector<2x1xf32> to vector<2x64xf32>
    %20 = arith.subf %16, %19 : vector<2x64xf32>
    %21 = math.exp %20 : vector<2x64xf32>
    %cst_17 = arith.constant dense<0.000000e+00> : vector<2xf32>
    %22 = vector.multi_reduction <add>, %21, %cst_17 [1] : vector<2x64xf32> to vector<2xf32>
    %23 = vector.shape_cast %22 : vector<2xf32> to vector<2x1xf32>
    %24 = tpu.reciprocal %23 {approx = true} : vector<2x1xf32> -> vector<2x1xf32>
    %25 = vector.broadcast %24 : vector<2x1xf32> to vector<2x64xf32>
    %26 = arith.mulf %21, %25 : vector<2x64xf32>
    %c0_18 = arith.constant 0 : index
    %c0_19 = arith.constant 0 : index
    %27 = vector.load %arg8[%c0_18, %c0_19] : memref<2x64xf32, #tpu.memory_space<vmem>>, vector<2x64xf32>
    tpu.vector_store %arg8[%c0_18, %c0_19], %26 {strides = array<i32>} : memref<2x64xf32, #tpu.memory_space<vmem>>, vector<2x64xf32>,
    %c0_20 = arith.constant 0 : index
    %c0_21 = arith.constant 0 : index
    %28 = vector.load %arg6[%c0_20, %c0_21] : memref<64x128xf32, #tpu.memory_space<vmem>>, vector<64x128xf32>
    %cst_22 = arith.constant dense<0.000000e+00> : vector<2x128xf32>
    %29 = tpu.matmul %26, %28, %cst_22 {dimension_numbers = #tpu.dot_dimension_numbers<[1], [0], [0], [1], [0, 0, 1, 1], [], []>} : vector<2x64xf32>, vector<64x128xf32>, vector<2x128xf32> -> vector<2x128xf32>
    %c0_23 = arith.constant 0 : index
    %c0_24 = arith.constant 0 : index
    %30 = vector.load %arg4[%c0_23, %c0_24] : memref<32x2xf32, #tpu.memory_space<vmem>>, vector<32x2xf32>
    %cst_25 = arith.constant dense<0.000000e+00> : vector<32x128xf32>
    %31 = tpu.matmul %30, %29, %cst_25 {dimension_numbers = #tpu.dot_dimension_numbers<[1], [0], [0], [1], [0, 0, 1, 1], [], []>} : vector<32x2xf32>, vector<2x128xf32>, vector<32x128xf32> -> vector<32x128xf32>
    %32 = arith.mulf %2, %31 : vector<32x128xf32>
    %cst_26 = arith.constant dense<0.000000e+00> : vector<32xf32>
    %33 = vector.multi_reduction <add>, %32, %cst_26 [1] : vector<32x128xf32> to vector<32xf32>
    %34 = vector.shape_cast %33 : vector<32xf32> to vector<32x1xf32>
    %c0_27 = arith.constant 0 : index
    %c0_28 = arith.constant 0 : index
    %35 = vector.load %arg9[%c0_27, %c0_28] : memref<32x1xf32, #tpu.memory_space<vmem>>, vector<32x1xf32>
    tpu.vector_store %arg9[%c0_27, %c0_28], %34 {strides = array<i32>} : memref<32x1xf32, #tpu.memory_space<vmem>>, vector<32x1xf32>,
    return
  }
}

</mosaic_0001>

<llo_original>
// kernel: tpu_custom_call.1
$region0: #{tpu_custom_call.1}
  #allocation0 [shape = 'u32[]', space=smem, size = 0x4, offset = 0x4, fixed_abs, tag = 'smem constant byte address 0x4 - core index']
  #allocation1 [shape = 'u32[144,128]{1,0:T(1,128)}', space=vmem, size = 0x12000, scoped, tag = 'internal scratch']
  #allocation2 [shape = 'f32[1]{0:T(128)S(6)}', space=smem, size = 0x200, scoped, tag = 'scoped memory for tpu_custom_call.1']
  %s0 = inlined_call_operand.hbm [shape: f32[32,33], index: 0, kind: input, shape index: {}]
  %s1 = inlined_call_operand.vmem [shape: f32[2,33], index: 1, kind: input, shape index: {}]
  %s2 = inlined_call_operand.vmem [shape: f32[33,128], index: 2, kind: input, shape index: {}]
  %s3 = inlined_call_operand.hbm [shape: f32[33,64], index: 3, kind: input, shape index: {}]
  %s4 = inlined_call_operand.vmem [shape: f32[32,2], index: 4, kind: input, shape index: {}]
  %s5 = inlined_call_operand.vmem [shape: f32[2,32], index: 5, kind: input, shape index: {}]
  %s6 = inlined_call_operand.hbm [shape: f32[64,128], index: 6, kind: input, shape index: {}]
  %s7 = inlined_call_operand.<no memory space> [shape: f32[1], index: 7, kind: input, shape index: {}]
  %s8 = inlined_call_operand.hbm [shape: f32[2,64], index: 8, kind: output, shape index: {0}]
  %s9 = inlined_call_operand.vmem [shape: f32[32,1], index: 9, kind: output, shape index: {1}]
  %10 = xla_tuple %s8, %s9
  %s11 = sld [smem:[#allocation0]]
  $region62: #{tpu_custom_call.1} parent=0
    _
  %s13 = ssub.s32 1, %s11
  %s14 = scalar_select 0, %s13, %s11
  %15 = sst [smem:[#allocation2]] %s7
  $region1: #{tpu_custom_call.1} parent=0
    #allocation3 [shape = 'u8[16384]{0}', space=vmem, size = 0x4000, scoped, tag = 'input window, operand 0, single buffered']
    #allocation4 [shape = 's32[1]{0}', space=sflag, size = 0x4, scoped, tag = 'scoped memory for tpu_custom_call.1']
    #allocation5 [shape = 's32[1]{0}', space=sflag, size = 0x4, scoped, tag = 'scoped memory for tpu_custom_call.1']
    #allocation6 [shape = 'u8[20480]{0}', space=vmem, size = 0x5000, scoped, tag = 'input window, operand 3, single buffered']
    #allocation7 [shape = 's32[1]{0}', space=sflag, size = 0x4, scoped, tag = 'scoped memory for tpu_custom_call.1']
    #allocation8 [shape = 'u8[32768]{0}', space=vmem, size = 0x8000, scoped, tag = 'input window, operand 6, single buffered']
    #allocation9 [shape = 'u8[1024]{0}', space=vmem, size = 0x400, scoped, tag = 'output window, operand 0, single buffered']
    %16 = vsyncpa [#allocation4], 0
    %17 = vsyncpa [#allocation7], 0
    %18 = vsyncpa [#allocation5], 0
    // Predicated region
    $region2: #{tpu_custom_call.1} parent=1 // pred_check
      _
    $region3: #{tpu_custom_call.1} parent=1 // pred_check_branch
      %20 = sbr.rel (0) target = $region5
    $region4: #{tpu_custom_call.1} parent=1 // pred_region
      %s22 = ssub.s32 512, 512
      %23 = vsyncadd [#allocation4], %s22
      %s24 = sshll.u32 [#allocation3], 4
      %s25 = int_to_ptr.vmem [resolvable:$true] %s24
      %30 = dma.hbm_to_vmem [thread:$0]  %s0, 512, %s25, [#allocation4], 128, 128, 8
    $region5: #{tpu_custom_call.1} parent=1 // pred_fallthru
      _
    // Predicated region
    $region6: #{tpu_custom_call.1} parent=1 // pred_check
      _
    $region7: #{tpu_custom_call.1} parent=1 // pred_check_branch
      %32 = sbr.rel (0) target = $region9
    $region8: #{tpu_custom_call.1} parent=1 // pred_region
      _
    $region9: #{tpu_custom_call.1} parent=1 // pred_fallthru
      _
    // Predicated region
    $region10: #{tpu_custom_call.1} parent=1 // pred_check
      _
    $region11: #{tpu_custom_call.1} parent=1 // pred_check_branch
      %34 = sbr.rel (0) target = $region13
    $region12: #{tpu_custom_call.1} parent=1 // pred_region
      _
    $region13: #{tpu_custom_call.1} parent=1 // pred_fallthru
      _
    // Predicated region
    $region14: #{tpu_custom_call.1} parent=1 // pred_check
      _
    $region15: #{tpu_custom_call.1} parent=1 // pred_check_branch
      %36 = sbr.rel (0) target = $region17
    $region16: #{tpu_custom_call.1} parent=1 // pred_region
      %s38 = ssub.s32 640, 640
      %39 = vsyncadd [#allocation7], %s38
      %s40 = sshll.u32 [#allocation6], 4
      %s41 = int_to_ptr.vmem [resolvable:$true] %s40
      %46 = dma.hbm_to_vmem [thread:$0]  %s3, 640, %s41, [#allocation7], 128, 128, 8
    $region17: #{tpu_custom_call.1} parent=1 // pred_fallthru
      _
    // Predicated region
    $region18: #{tpu_custom_call.1} parent=1 // pred_check
      _
    $region19: #{tpu_custom_call.1} parent=1 // pred_check_branch
      %48 = sbr.rel (0) target = $region21
    $region20: #{tpu_custom_call.1} parent=1 // pred_region
      _
    $region21: #{tpu_custom_call.1} parent=1 // pred_fallthru
      _
    // Predicated region
    $region22: #{tpu_custom_call.1} parent=1 // pred_check
      _
    $region23: #{tpu_custom_call.1} parent=1 // pred_check_branch
      %50 = sbr.rel (0) target = $region25
    $region24: #{tpu_custom_call.1} parent=1 // pred_region
      _
    $region25: #{tpu_custom_call.1} parent=1 // pred_fallthru
      _
    // Predicated region
    $region26: #{tpu_custom_call.1} parent=1 // pred_check
      _
    $region27: #{tpu_custom_call.1} parent=1 // pred_check_branch
      %52 = sbr.rel (0) target = $region29
    $region28: #{tpu_custom_call.1} parent=1 // pred_region
      %s54 = ssub.s32 1024, 1024
      %55 = vsyncadd [#allocation7], %s54
      %s56 = sshll.u32 [#allocation8], 4
      %s57 = int_to_ptr.vmem [resolvable:$true] %s56
      %62 = dma.hbm_to_vmem [thread:$0]  %s6, 1024, %s57, [#allocation7], 128, 128, 8
    $region29: #{tpu_custom_call.1} parent=1 // pred_fallthru
      _
    // Predicated region
    $region30: #{tpu_custom_call.1} parent=1 // pred_check
      _
    $region31: #{tpu_custom_call.1} parent=1 // pred_check_branch
      %64 = sbr.rel (0) target = $region33
    $region32: #{tpu_custom_call.1} parent=1 // pred_region
      _
    $region33: #{tpu_custom_call.1} parent=1 // pred_fallthru
      _
    // Predicated region
    $region34: #{tpu_custom_call.1} parent=1 // pred_check
      _
    $region35: #{tpu_custom_call.1} parent=1 // pred_check_branch
      %66 = sbr.rel (0) target = $region37
    $region36: #{tpu_custom_call.1} parent=1 // pred_region
      %67 = dma.done [#allocation4], 512
    $region37: #{tpu_custom_call.1} parent=1 // pred_fallthru
      _
    // Predicated region
    $region38: #{tpu_custom_call.1} parent=1 // pred_check
      _
    $region39: #{tpu_custom_call.1} parent=1 // pred_check_branch
      %69 = sbr.rel (0) target = $region41
    $region40: #{tpu_custom_call.1} parent=1 // pred_region
      %70 = dma.done [#allocation7], 640
    $region41: #{tpu_custom_call.1} parent=1 // pred_fallthru
      _
    // Predicated region
    $region42: #{tpu_custom_call.1} parent=1 // pred_check
      _
    $region43: #{tpu_custom_call.1} parent=1 // pred_check_branch
      %72 = sbr.rel (0) target = $region45
    $region44: #{tpu_custom_call.1} parent=1 // pred_region
      %73 = dma.done [#allocation7], 1024
    $region45: #{tpu_custom_call.1} parent=1 // pred_fallthru
      _
    %v74 = vld [vmem:[#allocation3] sm:$0xff]
    %v75 = vld [vmem:[#allocation3 + $0x8] sm:$0xff]
    %v76 = vld [vmem:[#allocation3 + $0x10] sm:$0xff]
    %v77 = vld [vmem:[#allocation3 + $0x18] sm:$0xff]
    %v78 = vld [vmem:[%s2] sm:$0xff]
    %v79 = vld [vmem:[%s2 + $0x8] sm:$0xff]
    %v80 = vld [vmem:[%s2 + $0x10] sm:$0xff]
    %v81 = vld [vmem:[%s2 + $0x18] sm:$0xff]
    %v82 = vld [vmem:[%s2 + $0x20] sm:$0x1]
    %vm83 = vcmask 269312
    %v85 = vsel %vm83, %v74, 0
    %v88 = vsel %vm83, %v75, 0
    %v91 = vsel %vm83, %v76, 0
    %v94 = vsel %vm83, %v77, 0
    %vm96 = vcmask 1040384
    %v98 = vsel %vm96, %v82, 0
    %100 = vmatprep.subr.mxu0 0.0
    %101 = vmatpush1.msra.mxu0 %v78
    %102 = vmatprep.subr.mxu0 0.0
    %103 = vmatpush1.msra.mxu0 %v79
    %104 = vmatprep.subr.mxu0 0.0
    %105 = vmatpush1.msra.mxu0 %v80
    %106 = vmatprep.subr.mxu0 0.0
    %107 = vmatpush1.msra.mxu0 %v81
    %108 = vmatprep.subr.mxu0 0.0
    %109 = vmatpush1.msra.mxu0 %v98
    %110 = vmatprep.subr.mxu0 0.0
    %111 = vmatpush1.msra.mxu0 0.0
    %112 = vmatprep.subr.mxu0 0.0
    %113 = vmatpush1.msra.mxu0 0.0
    %114 = vmatprep.subr.mxu0 0.0
    %115 = vmatpush1.msra.mxu0 0.0
    %116 = vmatprep.subr.mxu0 0.0
    %117 = vmatpush1.msra.mxu0 0.0
    %118 = vmatprep.subr.mxu0 0.0
    %119 = vmatpush1.msra.mxu0 0.0
    %120 = vmatprep.subr.mxu0 0.0
    %121 = vmatpush1.msra.mxu0 0.0
    %122 = vmatprep.subr.mxu0 0.0
    %123 = vmatpush1.msra.mxu0 0.0
    %124 = vmatprep.subr.mxu0 0.0
    %125 = vmatpush1.msra.mxu0 0.0
    %126 = vmatprep.subr.mxu0 0.0
    %127 = vmatpush1.msra.mxu0 0.0
    %128 = vmatprep.subr.mxu0 0.0
    %129 = vmatpush1.msra.mxu0 0.0
    %130 = vmatprep.subr.mxu0 0.0
    %131 = vmatpush1.msra.mxu0 0.0
    %132 = vmatprep.subr.mxu0 0.0
    %133 = vmatpush1.msra.mxu0 0.0
    %134 = vmatprep.subr.mxu0 0.0
    %135 = vmatpush1.msra.mxu0 0.0
    %136 = vmatprep.subr.mxu0 0.0
    %137 = vmatpush1.msra.mxu0 0.0
    %138 = vmatprep.subr.mxu0 0.0
    %139 = vmatpush1.msra.mxu0 0.0
    %140 = vmatprep.subr.mxu0 0.0
    %141 = vmatpush1.msra.mxu0 0.0
    %142 = vmatprep.subr.mxu0 0.0
    %143 = vmatpush1.msra.mxu0 0.0
    %144 = vmatprep.subr.mxu0 0.0
    %145 = vmatpush1.msra.mxu0 0.0
    %146 = vmatprep.subr.mxu0 0.0
    %147 = vmatpush1.msra.mxu0 0.0
    %148 = vmatprep.subr.mxu0 0.0
    %149 = vmatpush1.msra.mxu0 0.0
    %150 = vmatprep.subr.mxu0 0.0
    %151 = vmatpush1.msra.mxu0 0.0
    %152 = vmatprep.subr.mxu0 0.0
    %153 = vmatpush1.msra.mxu0 0.0
    %154 = vmatprep.subr.mxu0 0.0
    %155 = vmatpush1.msra.mxu0 0.0
    %156 = vmatprep.subr.mxu0 0.0
    %157 = vmatpush1.msra.mxu0 0.0
    %158 = vmatprep.subr.mxu0 0.0
    %159 = vmatpush1.msra.mxu0 0.0
    %160 = vmatprep.subr.mxu0 0.0
    %161 = vmatpush1.msra.mxu0 0.0
    %162 = vmatprep.subr.mxu0 0.0
    %163 = vmatpush1.msra.mxu0 0.0
    %164 = vmatprep.mubr.f32.mxu0 0.0
    %165 = vmatmul.mubr.f32.gmra.mrb[0].mxu0 %v85
    %v166 = vpop.f32.mrb[0].mxu0
    %v167 = vadd.f32 0.0, %v166
    %v168 = vpop.f32.mrb[0].mxu0
    %169 = vmatprep.mubr.f32.mxu0 0.0
    %170 = vmatmul.mubr.f32.gmra.mrb[0].mxu0 %v88
    %v171 = vpop.f32.mrb[0].mxu0
    %v172 = vadd.f32 0.0, %v171
    %v173 = vpop.f32.mrb[0].mxu0
    %174 = vmatprep.mubr.f32.mxu0 0.0
    %175 = vmatmul.mubr.f32.gmra.mrb[0].mxu0 %v91
    %v176 = vpop.f32.mrb[0].mxu0
    %v177 = vadd.f32 0.0, %v176
    %v178 = vpop.f32.mrb[0].mxu0
    %179 = vmatprep.mubr.f32.mxu0 0.0
    %180 = vmatmul.mubr.f32.gmra.mrb[0].mxu0 %v94
    %v181 = vpop.f32.mrb[0].mxu0
    %v182 = vadd.f32 0.0, %v181
    %v183 = vpop.f32.mrb[0].mxu0
    %184 = vdwg.mxu0
    %v185 = vld [vmem:[%s1] sm:$0x3]
    %v186 = vld [vmem:[#allocation6] sm:$0xff]
    %v187 = vld [vmem:[#allocation6 + $0x8] sm:$0xff]
    %v188 = vld [vmem:[#allocation6 + $0x10] sm:$0xff]
    %v189 = vld [vmem:[#allocation6 + $0x18] sm:$0xff]
    %v190 = vld [vmem:[#allocation6 + $0x20] sm:$0x1]
    %v192 = vsel %vm83, %v185, 0
    %v195 = vsel %vm96, %v190, 0
    %197 = vmatprep.subr.mxu0 0.0
    %198 = vmatpush1.msra.mxu0 %v186
    %199 = vmatprep.subr.mxu0 0.0
    %200 = vmatpush1.msra.mxu0 %v187
    %201 = vmatprep.subr.mxu0 0.0
    %202 = vmatpush1.msra.mxu0 %v188
    %203 = vmatprep.subr.mxu0 0.0
    %204 = vmatpush1.msra.mxu0 %v189
    %205 = vmatprep.subr.mxu0 0.0
    %206 = vmatpush1.msra.mxu0 %v195
    %207 = vmatprep.subr.mxu0 0.0
    %208 = vmatpush1.msra.mxu0 0.0
    %209 = vmatprep.subr.mxu0 0.0
    %210 = vmatpush1.msra.mxu0 0.0
    %211 = vmatprep.subr.mxu0 0.0
    %212 = vmatpush1.msra.mxu0 0.0
    %213 = vmatprep.subr.mxu0 0.0
    %214 = vmatpush1.msra.mxu0 0.0
    %215 = vmatprep.subr.mxu0 0.0
    %216 = vmatpush1.msra.mxu0 0.0
    %217 = vmatprep.subr.mxu0 0.0
    %218 = vmatpush1.msra.mxu0 0.0
    %219 = vmatprep.subr.mxu0 0.0
    %220 = vmatpush1.msra.mxu0 0.0
    %221 = vmatprep.subr.mxu0 0.0
    %222 = vmatpush1.msra.mxu0 0.0
    %223 = vmatprep.subr.mxu0 0.0
    %224 = vmatpush1.msra.mxu0 0.0
    %225 = vmatprep.subr.mxu0 0.0
    %226 = vmatpush1.msra.mxu0 0.0
    %227 = vmatprep.subr.mxu0 0.0
    %228 = vmatpush1.msra.mxu0 0.0
    %229 = vmatprep.subr.mxu0 0.0
    %230 = vmatpush1.msra.mxu0 0.0
    %231 = vmatprep.subr.mxu0 0.0
    %232 = vmatpush1.msra.mxu0 0.0
    %233 = vmatprep.subr.mxu0 0.0
    %234 = vmatpush1.msra.mxu0 0.0
    %235 = vmatprep.subr.mxu0 0.0
    %236 = vmatpush1.msra.mxu0 0.0
    %237 = vmatprep.subr.mxu0 0.0
    %238 = vmatpush1.msra.mxu0 0.0
    %239 = vmatprep.subr.mxu0 0.0
    %240 = vmatpush1.msra.mxu0 0.0
    %241 = vmatprep.subr.mxu0 0.0
    %242 = vmatpush1.msra.mxu0 0.0
    %243 = vmatprep.subr.mxu0 0.0
    %244 = vmatpush1.msra.mxu0 0.0
    %245 = vmatprep.subr.mxu0 0.0
    %246 = vmatpush1.msra.mxu0 0.0
    %247 = vmatprep.subr.mxu0 0.0
    %248 = vmatpush1.msra.mxu0 0.0
    %249 = vmatprep.subr.mxu0 0.0
    %250 = vmatpush1.msra.mxu0 0.0
    %251 = vmatprep.subr.mxu0 0.0
    %252 = vmatpush1.msra.mxu0 0.0
    %253 = vmatprep.subr.mxu0 0.0
    %254 = vmatpush1.msra.mxu0 0.0
    %255 = vmatprep.subr.mxu0 0.0
    %256 = vmatpush1.msra.mxu0 0.0
    %257 = vmatprep.subr.mxu0 0.0
    %258 = vmatpush1.msra.mxu0 0.0
    %259 = vmatprep.subr.mxu0 0.0
    %260 = vmatpush1.msra.mxu0 0.0
    %261 = vmatprep.mubr.f32.mxu0 0.0
    %262 = vmatmul.mubr.f32.gmra.mrb[0].mxu0 %v192
    %v263 = vpop.f32.mrb[0].mxu0
    %v264 = vadd.f32 0.0, %v263
    %v265 = vpop.f32.mrb[0].mxu0
    %266 = vdwg.mxu0
    %v267 = vld [vmem:[%s4] sm:$0xff]
    %v268 = vld [vmem:[%s4 + $0x8] sm:$0xff]
    %v269 = vld [vmem:[%s4 + $0x10] sm:$0xff]
    %v270 = vld [vmem:[%s4 + $0x18] sm:$0xff]
    %vm271 = vcmask 15360
    %v273 = vsel %vm271, %v267, 0
    %v276 = vsel %vm271, %v268, 0
    %v279 = vsel %vm271, %v269, 0
    %v282 = vsel %vm271, %v270, 0
    %vm284 = vcmask 1041408
    %v286 = vsel %vm284, %v264, 0
    %288 = vmatprep.subr.mxu0 0.0
    %289 = vmatpush1.msra.mxu0 %v286
    %290 = vmatprep.subr.mxu0 0.0
    %291 = vmatpush1.msra.mxu0 0.0
    %292 = vmatprep.subr.mxu0 0.0
    %293 = vmatpush1.msra.mxu0 0.0
    %294 = vmatprep.subr.mxu0 0.0
    %295 = vmatpush1.msra.mxu0 0.0
    %296 = vmatprep.subr.mxu0 0.0
    %297 = vmatpush1.msra.mxu0 0.0
    %298 = vmatprep.subr.mxu0 0.0
    %299 = vmatpush1.msra.mxu0 0.0
    %300 = vmatprep.subr.mxu0 0.0
    %301 = vmatpush1.msra.mxu0 0.0
    %302 = vmatprep.subr.mxu0 0.0
    %303 = vmatpush1.msra.mxu0 0.0
    %304 = vmatprep.subr.mxu0 0.0
    %305 = vmatpush1.msra.mxu0 0.0
    %306 = vmatprep.subr.mxu0 0.0
    %307 = vmatpush1.msra.mxu0 0.0
    %308 = vmatprep.subr.mxu0 0.0
    %309 = vmatpush1.msra.mxu0 0.0
    %310 = vmatprep.subr.mxu0 0.0
    %311 = vmatpush1.msra.mxu0 0.0
    %312 = vmatprep.subr.mxu0 0.0
    %313 = vmatpush1.msra.mxu0 0.0
    %314 = vmatprep.subr.mxu0 0.0
    %315 = vmatpush1.msra.mxu0 0.0
    %316 = vmatprep.subr.mxu0 0.0
    %317 = vmatpush1.msra.mxu0 0.0
    %318 = vmatprep.subr.mxu0 0.0
    %319 = vmatpush1.msra.mxu0 0.0
    %320 = vmatprep.subr.mxu0 0.0
    %321 = vmatpush1.msra.mxu0 0.0
    %322 = vmatprep.subr.mxu0 0.0
    %323 = vmatpush1.msra.mxu0 0.0
    %324 = vmatprep.subr.mxu0 0.0
    %325 = vmatpush1.msra.mxu0 0.0
    %326 = vmatprep.subr.mxu0 0.0
    %327 = vmatpush1.msra.mxu0 0.0
    %328 = vmatprep.subr.mxu0 0.0
    %329 = vmatpush1.msra.mxu0 0.0
    %330 = vmatprep.subr.mxu0 0.0
    %331 = vmatpush1.msra.mxu0 0.0
    %332 = vmatprep.subr.mxu0 0.0
    %333 = vmatpush1.msra.mxu0 0.0
    %334 = vmatprep.subr.mxu0 0.0
    %335 = vmatpush1.msra.mxu0 0.0
    %336 = vmatprep.subr.mxu0 0.0
    %337 = vmatpush1.msra.mxu0 0.0
    %338 = vmatprep.subr.mxu0 0.0
    %339 = vmatpush1.msra.mxu0 0.0
    %340 = vmatprep.subr.mxu0 0.0
    %341 = vmatpush1.msra.mxu0 0.0
    %342 = vmatprep.subr.mxu0 0.0
    %343 = vmatpush1.msra.mxu0 0.0
    %344 = vmatprep.subr.mxu0 0.0
    %345 = vmatpush1.msra.mxu0 0.0
    %346 = vmatprep.subr.mxu0 0.0
    %347 = vmatpush1.msra.mxu0 0.0
    %348 = vmatprep.subr.mxu0 0.0
    %349 = vmatpush1.msra.mxu0 0.0
    %350 = vmatprep.subr.mxu0 0.0
    %351 = vmatpush1.msra.mxu0 0.0
    %352 = vmatprep.mubr.f32.mxu0 0.0
    %353 = vmatmul.mubr.f32.gmra.mrb[0].mxu0 %v273
    %v354 = vpop.f32.mrb[0].mxu0
    %v355 = vadd.f32 0.0, %v354
    %v356 = vpop.f32.mrb[0].mxu0
    %357 = vmatprep.mubr.f32.mxu0 0.0
    %358 = vmatmul.mubr.f32.gmra.mrb[0].mxu0 %v276
    %v359 = vpop.f32.mrb[0].mxu0
    %v360 = vadd.f32 0.0, %v359
    %v361 = vpop.f32.mrb[0].mxu0
    %362 = vmatprep.mubr.f32.mxu0 0.0
    %363 = vmatmul.mubr.f32.gmra.mrb[0].mxu0 %v279
    %v364 = vpop.f32.mrb[0].mxu0
    %v365 = vadd.f32 0.0, %v364
    %v366 = vpop.f32.mrb[0].mxu0
    %367 = vmatprep.mubr.f32.mxu0 0.0
    %368 = vmatmul.mubr.f32.gmra.mrb[0].mxu0 %v282
    %v369 = vpop.f32.mrb[0].mxu0
    %v370 = vadd.f32 0.0, %v369
    %v371 = vpop.f32.mrb[0].mxu0
    %372 = vdwg.mxu0
    %v373 = vadd.f32 %v167, %v355
    %v374 = vadd.f32 %v172, %v360
    %v375 = vadd.f32 %v177, %v365
    %v376 = vadd.f32 %v182, %v370
    %v377 = vmax.f32 %v373, 0.0
    %v378 = vmax.f32 %v374, 0.0
    %v379 = vmax.f32 %v375, 0.0
    %v380 = vmax.f32 %v376, 0.0
    %v381 = vld [vmem:[%s5] sm:$0x3]
    %s382 = sld [smem:[#allocation2]]
    %v383 = vstv %s382
    %vm384 = vcmask 261120
    %v386 = vsel %vm384, %v381, 0
    %388 = vmatprep.subr.mxu0 0.0
    %389 = vmatpush1.msra.mxu0 %v377
    %390 = vmatprep.subr.mxu0 0.0
    %391 = vmatpush1.msra.mxu0 %v378
    %392 = vmatprep.subr.mxu0 0.0
    %393 = vmatpush1.msra.mxu0 %v379
    %394 = vmatprep.subr.mxu0 0.0
    %395 = vmatpush1.msra.mxu0 %v380
    %396 = vmatprep.subr.mxu0 0.0
    %397 = vmatpush1.msra.mxu0 0.0
    %398 = vmatprep.subr.mxu0 0.0
    %399 = vmatpush1.msra.mxu0 0.0
    %400 = vmatprep.subr.mxu0 0.0
    %401 = vmatpush1.msra.mxu0 0.0
    %402 = vmatprep.subr.mxu0 0.0
    %403 = vmatpush1.msra.mxu0 0.0
    %404 = vmatprep.subr.mxu0 0.0
    %405 = vmatpush1.msra.mxu0 0.0
    %406 = vmatprep.subr.mxu0 0.0
    %407 = vmatpush1.msra.mxu0 0.0
    %408 = vmatprep.subr.mxu0 0.0
    %409 = vmatpush1.msra.mxu0 0.0
    %410 = vmatprep.subr.mxu0 0.0
    %411 = vmatpush1.msra.mxu0 0.0
    %412 = vmatprep.subr.mxu0 0.0
    %413 = vmatpush1.msra.mxu0 0.0
    %414 = vmatprep.subr.mxu0 0.0
    %415 = vmatpush1.msra.mxu0 0.0
    %416 = vmatprep.subr.mxu0 0.0
    %417 = vmatpush1.msra.mxu0 0.0
    %418 = vmatprep.subr.mxu0 0.0
    %419 = vmatpush1.msra.mxu0 0.0
    %420 = vmatprep.subr.mxu0 0.0
    %421 = vmatpush1.msra.mxu0 0.0
    %422 = vmatprep.subr.mxu0 0.0
    %423 = vmatpush1.msra.mxu0 0.0
    %424 = vmatprep.subr.mxu0 0.0
    %425 = vmatpush1.msra.mxu0 0.0
    %426 = vmatprep.subr.mxu0 0.0
    %427 = vmatpush1.msra.mxu0 0.0
    %428 = vmatprep.subr.mxu0 0.0
    %429 = vmatpush1.msra.mxu0 0.0
    %430 = vmatprep.subr.mxu0 0.0
    %431 = vmatpush1.msra.mxu0 0.0
    %432 = vmatprep.subr.mxu0 0.0
    %433 = vmatpush1.msra.mxu0 0.0
    %434 = vmatprep.subr.mxu0 0.0
    %435 = vmatpush1.msra.mxu0 0.0
    %436 = vmatprep.subr.mxu0 0.0
    %437 = vmatpush1.msra.mxu0 0.0
    %438 = vmatprep.subr.mxu0 0.0
    %439 = vmatpush1.msra.mxu0 0.0
    %440 = vmatprep.subr.mxu0 0.0
    %441 = vmatpush1.msra.mxu0 0.0
    %442 = vmatprep.subr.mxu0 0.0
    %443 = vmatpush1.msra.mxu0 0.0
    %444 = vmatprep.subr.mxu0 0.0
    %445 = vmatpush1.msra.mxu0 0.0
    %446 = vmatprep.subr.mxu0 0.0
    %447 = vmatpush1.msra.mxu0 0.0
    %448 = vmatprep.subr.mxu0 0.0
    %449 = vmatpush1.msra.mxu0 0.0
    %450 = vmatprep.subr.mxu0 0.0
    %451 = vmatpush1.msra.mxu0 0.0
    %452 = vmatprep.mubr.f32.mxu0 0.0
    %453 = vmatmul.mubr.f32.gmra.mrb[0].mxu0 %v386
    %v454 = vpop.f32.mrb[0].mxu0
    %v455 = vadd.f32 %v383, %v454
    %v456 = vpop.f32.mrb[0].mxu0
    %457 = vdwg.mxu0
    %vm458 = vcmask 517120
    %v459 = vsel %vm458, %v455, -inf
    %460 = vmax.xlane.f32.xlu0 %v459
    %v461 = vpop.xlane.xlu0 %460
    %v462 = vsub.f32 %v455, %v461
    %v463 = vmul.f32 %v462, 1.442695
    %v464 = vpow.pop %v463
    %v465 = vsel %vm458, %v464, 0.0
    %466 = vadd.xlane.f32.xlu0 %v465
    %v467 = vpop.xlane.xlu0 %466
    %v468 = vrcp.pop %v467
    %v469 = vmul.f32 %v464, %v468
    %470 = vst.msk [vmem:[#allocation9] sm:$0x3] %vm458, %v469
    %v471 = vld [vmem:[#allocation8] sm:$0xff]
    %v472 = vld [vmem:[#allocation8 + $0x8] sm:$0xff]
    %v473 = vld [vmem:[#allocation8 + $0x10] sm:$0xff]
    %v474 = vld [vmem:[#allocation8 + $0x18] sm:$0xff]
    %v475 = vld [vmem:[#allocation8 + $0x20] sm:$0xff]
    %v476 = vld [vmem:[#allocation8 + $0x28] sm:$0xff]
    %v477 = vld [vmem:[#allocation8 + $0x30] sm:$0xff]
    %v478 = vld [vmem:[#allocation8 + $0x38] sm:$0xff]
    %vm479 = vcmask 523264
    %v481 = vsel %vm479, %v469, 0
    %483 = vmatprep.subr.mxu0 0.0
    %484 = vmatpush1.msra.mxu0 %v471
    %485 = vmatprep.subr.mxu0 0.0
    %486 = vmatpush1.msra.mxu0 %v472
    %487 = vmatprep.subr.mxu0 0.0
    %488 = vmatpush1.msra.mxu0 %v473
    %489 = vmatprep.subr.mxu0 0.0
    %490 = vmatpush1.msra.mxu0 %v474
    %491 = vmatprep.subr.mxu0 0.0
    %492 = vmatpush1.msra.mxu0 %v475
    %493 = vmatprep.subr.mxu0 0.0
    %494 = vmatpush1.msra.mxu0 %v476
    %495 = vmatprep.subr.mxu0 0.0
    %496 = vmatpush1.msra.mxu0 %v477
    %497 = vmatprep.subr.mxu0 0.0
    %498 = vmatpush1.msra.mxu0 %v478
    %499 = vmatprep.subr.mxu0 0.0
    %500 = vmatpush1.msra.mxu0 0.0
    %501 = vmatprep.subr.mxu0 0.0
    %502 = vmatpush1.msra.mxu0 0.0
    %503 = vmatprep.subr.mxu0 0.0
    %504 = vmatpush1.msra.mxu0 0.0
    %505 = vmatprep.subr.mxu0 0.0
    %506 = vmatpush1.msra.mxu0 0.0
    %507 = vmatprep.subr.mxu0 0.0
    %508 = vmatpush1.msra.mxu0 0.0
    %509 = vmatprep.subr.mxu0 0.0
    %510 = vmatpush1.msra.mxu0 0.0
    %511 = vmatprep.subr.mxu0 0.0
    %512 = vmatpush1.msra.mxu0 0.0
    %513 = vmatprep.subr.mxu0 0.0
    %514 = vmatpush1.msra.mxu0 0.0
    %515 = vmatprep.subr.mxu0 0.0
    %516 = vmatpush1.msra.mxu0 0.0
    %517 = vmatprep.subr.mxu0 0.0
    %518 = vmatpush1.msra.mxu0 0.0
    %519 = vmatprep.subr.mxu0 0.0
    %520 = vmatpush1.msra.mxu0 0.0
    %521 = vmatprep.subr.mxu0 0.0
    %522 = vmatpush1.msra.mxu0 0.0
    %523 = vmatprep.subr.mxu0 0.0
    %524 = vmatpush1.msra.mxu0 0.0
    %525 = vmatprep.subr.mxu0 0.0
    %526 = vmatpush1.msra.mxu0 0.0
    %527 = vmatprep.subr.mxu0 0.0
    %528 = vmatpush1.msra.mxu0 0.0
    %529 = vmatprep.subr.mxu0 0.0
    %530 = vmatpush1.msra.mxu0 0.0
    %531 = vmatprep.subr.mxu0 0.0
    %532 = vmatpush1.msra.mxu0 0.0
    %533 = vmatprep.subr.mxu0 0.0
    %534 = vmatpush1.msra.mxu0 0.0
    %535 = vmatprep.subr.mxu0 0.0
    %536 = vmatpush1.msra.mxu0 0.0
    %537 = vmatprep.subr.mxu0 0.0
    %538 = vmatpush1.msra.mxu0 0.0
    %539 = vmatprep.subr.mxu0 0.0
    %540 = vmatpush1.msra.mxu0 0.0
    %541 = vmatprep.subr.mxu0 0.0
    %542 = vmatpush1.msra.mxu0 0.0
    %543 = vmatprep.subr.mxu0 0.0
    %544 = vmatpush1.msra.mxu0 0.0
    %545 = vmatprep.subr.mxu0 0.0
    %546 = vmatpush1.msra.mxu0 0.0
    %547 = vmatprep.mubr.f32.mxu0 0.0
    %548 = vmatmul.mubr.f32.gmra.mrb[0].mxu0 %v481
    %v549 = vpop.f32.mrb[0].mxu0
    %v550 = vadd.f32 0.0, %v549
    %v551 = vpop.f32.mrb[0].mxu0
    %552 = vdwg.mxu0
    %v553 = vld [vmem:[%s4] sm:$0xff]
    %v554 = vld [vmem:[%s4 + $0x8] sm:$0xff]
    %v555 = vld [vmem:[%s4 + $0x10] sm:$0xff]
    %v556 = vld [vmem:[%s4 + $0x18] sm:$0xff]
    %v558 = vsel %vm271, %v553, 0
    %v561 = vsel %vm271, %v554, 0
    %v564 = vsel %vm271, %v555, 0
    %v567 = vsel %vm271, %v556, 0
    %v570 = vsel %vm284, %v550, 0
    %572 = vmatprep.subr.mxu0 0.0
    %573 = vmatpush1.msra.mxu0 %v570
    %574 = vmatprep.subr.mxu0 0.0
    %575 = vmatpush1.msra.mxu0 0.0
    %576 = vmatprep.subr.mxu0 0.0
    %577 = vmatpush1.msra.mxu0 0.0
    %578 = vmatprep.subr.mxu0 0.0
    %579 = vmatpush1.msra.mxu0 0.0
    %580 = vmatprep.subr.mxu0 0.0
    %581 = vmatpush1.msra.mxu0 0.0
    %582 = vmatprep.subr.mxu0 0.0
    %583 = vmatpush1.msra.mxu0 0.0
    %584 = vmatprep.subr.mxu0 0.0
    %585 = vmatpush1.msra.mxu0 0.0
    %586 = vmatprep.subr.mxu0 0.0
    %587 = vmatpush1.msra.mxu0 0.0
    %588 = vmatprep.subr.mxu0 0.0
    %589 = vmatpush1.msra.mxu0 0.0
    %590 = vmatprep.subr.mxu0 0.0
    %591 = vmatpush1.msra.mxu0 0.0
    %592 = vmatprep.subr.mxu0 0.0
    %593 = vmatpush1.msra.mxu0 0.0
    %594 = vmatprep.subr.mxu0 0.0
    %595 = vmatpush1.msra.mxu0 0.0
    %596 = vmatprep.subr.mxu0 0.0
    %597 = vmatpush1.msra.mxu0 0.0
    %598 = vmatprep.subr.mxu0 0.0
    %599 = vmatpush1.msra.mxu0 0.0
    %600 = vmatprep.subr.mxu0 0.0
    %601 = vmatpush1.msra.mxu0 0.0
    %602 = vmatprep.subr.mxu0 0.0
    %603 = vmatpush1.msra.mxu0 0.0
    %604 = vmatprep.subr.mxu0 0.0
    %605 = vmatpush1.msra.mxu0 0.0
    %606 = vmatprep.subr.mxu0 0.0
    %607 = vmatpush1.msra.mxu0 0.0
    %608 = vmatprep.subr.mxu0 0.0
    %609 = vmatpush1.msra.mxu0 0.0
    %610 = vmatprep.subr.mxu0 0.0
    %611 = vmatpush1.msra.mxu0 0.0
    %612 = vmatprep.subr.mxu0 0.0
    %613 = vmatpush1.msra.mxu0 0.0
    %614 = vmatprep.subr.mxu0 0.0
    %615 = vmatpush1.msra.mxu0 0.0
    %616 = vmatprep.subr.mxu0 0.0
    %617 = vmatpush1.msra.mxu0 0.0
    %618 = vmatprep.subr.mxu0 0.0
    %619 = vmatpush1.msra.mxu0 0.0
    %620 = vmatprep.subr.mxu0 0.0
    %621 = vmatpush1.msra.mxu0 0.0
    %622 = vmatprep.subr.mxu0 0.0
    %623 = vmatpush1.msra.mxu0 0.0
    %624 = vmatprep.subr.mxu0 0.0
    %625 = vmatpush1.msra.mxu0 0.0
    %626 = vmatprep.subr.mxu0 0.0
    %627 = vmatpush1.msra.mxu0 0.0
    %628 = vmatprep.subr.mxu0 0.0
    %629 = vmatpush1.msra.mxu0 0.0
    %630 = vmatprep.subr.mxu0 0.0
    %631 = vmatpush1.msra.mxu0 0.0
    %632 = vmatprep.subr.mxu0 0.0
    %633 = vmatpush1.msra.mxu0 0.0
    %634 = vmatprep.subr.mxu0 0.0
    %635 = vmatpush1.msra.mxu0 0.0
    %636 = vmatprep.mubr.f32.mxu0 0.0
    %637 = vmatmul.mubr.f32.gmra.mrb[0].mxu0 %v558
    %v638 = vpop.f32.mrb[0].mxu0
    %v639 = vadd.f32 0.0, %v638
    %v640 = vpop.f32.mrb[0].mxu0
    %641 = vmatprep.mubr.f32.mxu0 0.0
    %642 = vmatmul.mubr.f32.gmra.mrb[0].mxu0 %v561
    %v643 = vpop.f32.mrb[0].mxu0
    %v644 = vadd.f32 0.0, %v643
    %v645 = vpop.f32.mrb[0].mxu0
    %646 = vmatprep.mubr.f32.mxu0 0.0
    %647 = vmatmul.mubr.f32.gmra.mrb[0].mxu0 %v564
    %v648 = vpop.f32.mrb[0].mxu0
    %v649 = vadd.f32 0.0, %v648
    %v650 = vpop.f32.mrb[0].mxu0
    %651 = vmatprep.mubr.f32.mxu0 0.0
    %652 = vmatmul.mubr.f32.gmra.mrb[0].mxu0 %v567
    %v653 = vpop.f32.mrb[0].mxu0
    %v654 = vadd.f32 0.0, %v653
    %v655 = vpop.f32.mrb[0].mxu0
    %656 = vdwg.mxu0
    %v657 = vmul.f32 %v167, %v639
    %v658 = vmul.f32 %v172, %v644
    %v659 = vmul.f32 %v177, %v649
    %v660 = vmul.f32 %v182, %v654
    %661 = vadd.xlane.f32.xlu0 %v657
    %v662 = vpop.xlane.xlu0 %661
    %663 = vadd.xlane.f32.xlu0 %v658
    %v664 = vpop.xlane.xlu0 %663
    %665 = vadd.xlane.f32.xlu0 %v659
    %v666 = vpop.xlane.xlu0 %665
    %667 = vadd.xlane.f32.xlu0 %v660
    %v668 = vpop.xlane.xlu0 %667
    %vm669 = vcmask 7168
    %670 = vst.msk [vmem:[%s9] sm:$0xff] %vm669, %v662
    %671 = vst.msk [vmem:[%s9 + $0x8] sm:$0xff] %vm669, %v664
    %672 = vst.msk [vmem:[%s9 + $0x10] sm:$0xff] %vm669, %v666
    %673 = vst.msk [vmem:[%s9 + $0x18] sm:$0xff] %vm669, %v668
    // Predicated region
    $region46: #{tpu_custom_call.1} parent=1 // pred_check
      _
    $region47: #{tpu_custom_call.1} parent=1 // pred_check_branch
      %675 = sbr.rel (0) target = $region49
    $region48: #{tpu_custom_call.1} parent=1 // pred_region
      %s677 = ssub.s32 32, 32
      %678 = vsyncadd [#allocation5], %s677
      %s680 = sshll.u32 [#allocation9], 4
      %s681 = int_to_ptr.vmem [resolvable:$true] %s680
      %683 = dma.vmem_to_hbm [thread:$0]  %s681, 32, %s8, [#allocation5]
    $region49: #{tpu_custom_call.1} parent=1 // pred_fallthru
      _
    // Predicated region
    $region50: #{tpu_custom_call.1} parent=1 // pred_check
      _
    $region51: #{tpu_custom_call.1} parent=1 // pred_check_branch
      %685 = sbr.rel (0) target = $region53
    $region52: #{tpu_custom_call.1} parent=1 // pred_region
      _
    $region53: #{tpu_custom_call.1} parent=1 // pred_fallthru
      _
    // Predicated region
    $region54: #{tpu_custom_call.1} parent=1 // pred_check
      _
    $region55: #{tpu_custom_call.1} parent=1 // pred_check_branch
      %687 = sbr.rel (0) target = $region57
    $region56: #{tpu_custom_call.1} parent=1 // pred_region
      %688 = dma.done [#allocation5], 32
    $region57: #{tpu_custom_call.1} parent=1 // pred_fallthru
      _
    // Predicated region
    $region58: #{tpu_custom_call.1} parent=1 // pred_check
      _
    $region59: #{tpu_custom_call.1} parent=1 // pred_check_branch
      %690 = sbr.rel (0) target = $region61
    $region60: #{tpu_custom_call.1} parent=1 // pred_region
      _
    $region61: #{tpu_custom_call.1} parent=1 // pred_fallthru
      _
    %691 = vsyncpa [#allocation4], 1
    %692 = vsyncpa [#allocation7], 1
    %693 = vsyncpa [#allocation5], 1

</llo_original>
